<compile_context>
chip_gen: v7x
topology: tpu7x:2x2x1
jax: 0.10.0
libtpu: 0.0.40
codegen_flags: <defaults>
</compile_context>

<pallas_src>
import math

import jax
import jax.numpy as jnp
from jax.experimental import pallas as pl
from jax.experimental.pallas import tpu as pltpu


def _msa_kernel(x_ref, wqkv_ref, bqkv_ref, o_ref):
    # x_ref: (Bt, S, D) f32 | wqkv_ref: (H, Dh, 3*Dh) bf16 | bqkv_ref: (H, 1, 3*Dh) f32
    H, Dh, _ = wqkv_ref.shape
    Bt, S, D = x_ref.shape

    # Cast the MXU operand once per block (weights already bf16 from the wrapper);
    # flatten the batch tile into the sublane axis so the QKV projection is a
    # plain 2-D matmul with N = 3*Dh columns (one MXU op instead of three).
    x_bf = x_ref[...].astype(jnp.bfloat16).reshape(Bt * S, D)

    for h in range(H):                      # H is static -> unrolled at trace time
        xh = x_bf[:, h * Dh:(h + 1) * Dh]   # (Bt*S, Dh) head-h columns of x
        # Fused Q|K|V projection: bf16 operands, f32 accumulation, bias added in f32.
        qkv = jnp.dot(xh, wqkv_ref[h],
                      preferred_element_type=jnp.float32) + bqkv_ref[h]
        q = qkv[:, :Dh].reshape(Bt, S, Dh).astype(jnp.bfloat16)        # pre-scaled
        k = qkv[:, Dh:2 * Dh].reshape(Bt, S, Dh).astype(jnp.bfloat16)
        v = qkv[:, 2 * Dh:].reshape(Bt, S, Dh).astype(jnp.bfloat16)

        # scores = q @ k^T, contracting the last dims directly (no k.T copy through
        # the XLU); the 1/sqrt(Dh) scale is already folded into the Q weights/bias.
        scores = jnp.einsum('bqd,bkd->bqk', q, k,
                            preferred_element_type=jnp.float32)        # (Bt, S, S)

        # Numerically-stable softmax; elementwise math kept in f32 (v5e-friendly),
        # per-row division moved onto the EUP via an approximate reciprocal.
        m = jnp.max(scores, axis=-1, keepdims=True)
        e = jnp.exp(scores - m)
        attn = e * pl.reciprocal(jnp.sum(e, axis=-1, keepdims=True), approx=True)

        out_h = jnp.einsum('bqk,bkd->bqd', attn.astype(jnp.bfloat16), v,
                           preferred_element_type=jnp.float32)         # (Bt, S, Dh)
        # Head h occupies output columns [h*Dh:(h+1)*Dh] == torch.hstack layout.
        o_ref[:, :, h * Dh:(h + 1) * Dh] = out_h.astype(o_ref.dtype)


def my_msa(x, params, bt=None):
    """x: (B, S, D). params: per-head torch-layout weights/biases."""
    B, S, D = x.shape
    wq, bq = params["wq"], params["bq"]    # (H, Dh, Dh) torch (out, in), (H, Dh)
    wk, bk = params["wk"], params["bk"]
    wv, bv = params["wv"], params["bv"]
    H, Dh, _ = wq.shape
    assert D == H * Dh

    # One-time wrapper-side weight prep:
    #   * transpose to (in, out) so the kernel never transposes on the XLU,
    #   * fold the 1/sqrt(d_head) attention scale into the Q weights and bias,
    #   * concatenate Q|K|V so the kernel issues a single matmul per head,
    #   * cast weights to bf16 once (MXU operands); biases stay f32 (post-acc add).
    scale = 1.0 / math.sqrt(Dh)
    wqkv = jnp.concatenate(
        [jnp.swapaxes(wq, 1, 2) * scale,
         jnp.swapaxes(wk, 1, 2),
         jnp.swapaxes(wv, 1, 2)], axis=-1).astype(jnp.bfloat16)         # (H, Dh, 3*Dh)
    bqkv = jnp.concatenate([bq * scale, bk, bv],
                           axis=-1).reshape(H, 1, 3 * Dh).astype(jnp.float32)

    if bt is None:
        # Batch tile: largest divisor of B whose x block stays under ~2 MiB,
        # amortizing the ~0.35 us/step pipeline overhead.
        cap = max(1, (2 * 1024 * 1024) // (S * D * x.dtype.itemsize))
        bt = 1
        for cand in range(min(B, cap), 0, -1):
            if B % cand == 0:
                bt = cand
                break
    assert B % bt == 0, f"batch tile {bt} must divide batch {B}"

    return pl.pallas_call(
        _msa_kernel,
        out_shape=jax.ShapeDtypeStruct((B, S, D), x.dtype),
        grid_spec=pltpu.PrefetchScalarGridSpec(
            num_scalar_prefetch=0,
            grid=(B // bt,),
            in_specs=[
                # x consumed directly in (B, S, D) layout -- no wrapper transpose.
                pl.BlockSpec((bt, S, D), lambda b: (b, 0, 0)),
                # Weights/bias: constant block index -> DMA'd once, reused across steps.
                pl.BlockSpec((H, Dh, 3 * Dh), lambda b: (0, 0, 0)),
                pl.BlockSpec((H, 1, 3 * Dh), lambda b: (0, 0, 0)),
            ],
            # Output written directly in (B, S, D) layout (lane-dense last dim D).
            out_specs=pl.BlockSpec((bt, S, D), lambda b: (b, 0, 0)),
        ),
        compiler_params=pltpu.CompilerParams(
            dimension_semantics=("parallel",)),   # megacore / 2-TC sharding on v7x
    )(x, wqkv, bqkv)

# TODO(synk): for long sequences, tile the KV axis with a flash-style online
# softmax instead of materializing the full (S, S) scores block per head.


def _reference(x, params):
    """Pure-JAX f32 reference mirroring the PyTorch forward exactly."""
    B, S, D = x.shape
    wq, bq = params["wq"], params["bq"]
    wk, bk = params["wk"], params["bk"]
    wv, bv = params["wv"], params["bv"]
    H, Dh, _ = wq.shape
    outs = []
    for b in range(B):
        heads = []
        for h in range(H):
            seq = x[b, :, h * Dh:(h + 1) * Dh]
            q = seq @ wq[h].T + bq[h]
            k = seq @ wk[h].T + bk[h]
            v = seq @ wv[h].T + bv[h]
            attn = jax.nn.softmax(q @ k.T / math.sqrt(Dh), axis=-1)
            heads.append(attn @ v)
        outs.append(jnp.concatenate(heads, axis=1))
    return jnp.stack(outs, axis=0)


if __name__ == "__main__":
    B, S, D, H = 2, 8, 32, 2
    Dh = D // H

    key = jax.random.PRNGKey(0)
    kx, kq, kbq, kk, kbk, kv, kbv = jax.random.split(key, 7)

    x = jax.random.normal(kx, (B, S, D), dtype=jnp.float32)
    bound = 1.0 / math.sqrt(Dh)  # torch Linear-style uniform init range
    params = {
        "wq": jax.random.uniform(kq, (H, Dh, Dh), jnp.float32, -bound, bound),
        "bq": jax.random.uniform(kbq, (H, Dh), jnp.float32, -bound, bound),
        "wk": jax.random.uniform(kk, (H, Dh, Dh), jnp.float32, -bound, bound),
        "bk": jax.random.uniform(kbk, (H, Dh), jnp.float32, -bound, bound),
        "wv": jax.random.uniform(kv, (H, Dh, Dh), jnp.float32, -bound, bound),
        "bv": jax.random.uniform(kbv, (H, Dh), jnp.float32, -bound, bound),
    }

    out = my_msa(x, params)
    out = jax.block_until_ready(out)

    ref = _reference(x, params)
    assert out.shape == (B, S, D)
    # bf16 MXU operands (f32 accumulation) + EUP approx reciprocal in the kernel
    # vs. exact f32 reference => relaxed tolerance.
    assert jnp.allclose(out, ref, atol=5e-2, rtol=5e-2), "mismatch vs reference"

    print("KERNEL_OK")
</pallas_src>

<mosaic_0001>
module attributes {stable_mosaic.version = 11 : i64} {
  func.func @_msa_kernel(%arg0: i32, %arg1: memref<2x8x32xf32, #tpu.memory_space<vmem>>, %arg2: memref<2x16x48xbf16, #tpu.memory_space<vmem>>, %arg3: memref<2x1x48xf32, #tpu.memory_space<vmem>>, %arg4: memref<2x8x32xf32, #tpu.memory_space<vmem>>) attributes {dimension_semantics = [#tpu.dimension_semantics<parallel>], iteration_bounds = array<i64: 1>, scalar_prefetch = 0 : i64, scratch_operands = 0 : i64, tpu.core_type = #tpu.core_type<tc>, window_params = [{transform_indices = @transform_0, window_bounds = array<i64: 2, 8, 32>}, {pipeline_mode = #tpu.pipeline_mode<synchronous>, transform_indices = @transform_1, window_bounds = array<i64: 2, 16, 48>}, {pipeline_mode = #tpu.pipeline_mode<synchronous>, transform_indices = @transform_2, window_bounds = array<i64: 2, 1, 48>}, {transform_indices = @transform_3, window_bounds = array<i64: 2, 8, 32>}]} {
    %c0 = arith.constant 0 : index
    %c0_0 = arith.constant 0 : index
    %c0_1 = arith.constant 0 : index
    %0 = vector.load %arg1[%c0, %c0_0, %c0_1] : memref<2x8x32xf32, #tpu.memory_space<vmem>>, vector<2x8x32xf32>
    %1 = arith.truncf %0 : vector<2x8x32xf32> to vector<2x8x32xbf16>
    %2 = vector.shape_cast %1 : vector<2x8x32xbf16> to vector<16x32xbf16>
    %3 = vector.extract_strided_slice %2 {offsets = [0, 0], sizes = [16, 16], strides = [1, 1]} : vector<16x32xbf16> to vector<16x16xbf16>
    %c0_2 = arith.constant 0 : index
    %c0_3 = arith.constant 0 : index
    %c0_4 = arith.constant 0 : index
    %4 = vector.load %arg2[%c0_2, %c0_3, %c0_4] : memref<2x16x48xbf16, #tpu.memory_space<vmem>>, vector<1x16x48xbf16>
    %5 = vector.shape_cast %4 : vector<1x16x48xbf16> to vector<16x48xbf16>
    %cst = arith.constant dense<0.000000e+00> : vector<16x48xf32>
    %6 = tpu.matmul %3, %5, %cst {dimension_numbers = #tpu.dot_dimension_numbers<[1], [0], [0], [1], [0, 0, 1, 1], [], []>} : vector<16x16xbf16>, vector<16x48xbf16>, vector<16x48xf32> -> vector<16x48xf32>
    %c0_5 = arith.constant 0 : index
    %c0_6 = arith.constant 0 : index
    %c0_7 = arith.constant 0 : index
    %7 = vector.load %arg3[%c0_5, %c0_6, %c0_7] : memref<2x1x48xf32, #tpu.memory_space<vmem>>, vector<1x1x48xf32>
    %8 = vector.shape_cast %7 : vector<1x1x48xf32> to vector<1x48xf32>
    %9 = vector.broadcast %8 : vector<1x48xf32> to vector<16x48xf32>
    %10 = arith.addf %6, %9 : vector<16x48xf32>
    %11 = vector.extract_strided_slice %10 {offsets = [0, 0], sizes = [16, 16], strides = [1, 1]} : vector<16x48xf32> to vector<16x16xf32>
    %12 = vector.shape_cast %11 : vector<16x16xf32> to vector<2x8x16xf32>
    %13 = arith.truncf %12 : vector<2x8x16xf32> to vector<2x8x16xbf16>
    %14 = vector.extract_strided_slice %10 {offsets = [0, 16], sizes = [16, 16], strides = [1, 1]} : vector<16x48xf32> to vector<16x16xf32>
    %15 = vector.shape_cast %14 : vector<16x16xf32> to vector<2x8x16xf32>
    %16 = arith.truncf %15 : vector<2x8x16xf32> to vector<2x8x16xbf16>
    %17 = vector.extract_strided_slice %10 {offsets = [0, 32], sizes = [16, 16], strides = [1, 1]} : vector<16x48xf32> to vector<16x16xf32>
    %18 = vector.shape_cast %17 : vector<16x16xf32> to vector<2x8x16xf32>
    %19 = arith.truncf %18 : vector<2x8x16xf32> to vector<2x8x16xbf16>
    "tpu.trace_start"() <{level = 10 : i32, message = "bqd,bkd->bqk"}> : () -> ()
    %cst_8 = arith.constant dense<0.000000e+00> : vector<2x8x8xf32>
    %20 = tpu.matmul %13, %16, %cst_8 {dimension_numbers = #tpu.dot_dimension_numbers<[2], [2], [1], [1], [0, 0, 0, 1, 1, 1], [0], [0]>} : vector<2x8x16xbf16>, vector<2x8x16xbf16>, vector<2x8x8xf32> -> vector<2x8x8xf32>
    "tpu.trace_stop"() : () -> ()
    %cst_9 = arith.constant dense<0xFF800000> : vector<2x8xf32>
    %21 = vector.multi_reduction <maximumf>, %20, %cst_9 [2] : vector<2x8x8xf32> to vector<2x8xf32>
    %22 = vector.shape_cast %21 : vector<2x8xf32> to vector<2x8x1xf32>
    %23 = vector.broadcast %22 : vector<2x8x1xf32> to vector<2x8x8xf32>
    %24 = arith.subf %20, %23 : vector<2x8x8xf32>
    %25 = math.exp %24 : vector<2x8x8xf32>
    %cst_10 = arith.constant dense<0.000000e+00> : vector<2x8xf32>
    %26 = vector.multi_reduction <add>, %25, %cst_10 [2] : vector<2x8x8xf32> to vector<2x8xf32>
    %27 = vector.shape_cast %26 : vector<2x8xf32> to vector<2x8x1xf32>
    %28 = tpu.reciprocal %27 {approx = true} : vector<2x8x1xf32> -> vector<2x8x1xf32>
    %29 = vector.broadcast %28 : vector<2x8x1xf32> to vector<2x8x8xf32>
    %30 = arith.mulf %25, %29 : vector<2x8x8xf32>
    %31 = arith.truncf %30 : vector<2x8x8xf32> to vector<2x8x8xbf16>
    "tpu.trace_start"() <{level = 10 : i32, message = "bqk,bkd->bqd"}> : () -> ()
    %cst_11 = arith.constant dense<0.000000e+00> : vector<2x8x16xf32>
    %32 = tpu.matmul %31, %19, %cst_11 {dimension_numbers = #tpu.dot_dimension_numbers<[2], [1], [1], [2], [0, 0, 0, 1, 1, 2], [0], [0]>} : vector<2x8x8xbf16>, vector<2x8x16xbf16>, vector<2x8x16xf32> -> vector<2x8x16xf32>
    "tpu.trace_stop"() : () -> ()
    %c0_12 = arith.constant 0 : index
    %c0_13 = arith.constant 0 : index
    %c0_14 = arith.constant 0 : index
    %33 = vector.load %arg4[%c0_12, %c0_13, %c0_14] : memref<2x8x32xf32, #tpu.memory_space<vmem>>, vector<2x8x16xf32>
    tpu.vector_store %arg4[%c0_12, %c0_13, %c0_14], %32 {strides = array<i32>} : memref<2x8x32xf32, #tpu.memory_space<vmem>>, vector<2x8x16xf32>,
    %34 = vector.extract_strided_slice %2 {offsets = [0, 16], sizes = [16, 16], strides = [1, 1]} : vector<16x32xbf16> to vector<16x16xbf16>
    %c1 = arith.constant 1 : index
    %c0_15 = arith.constant 0 : index
    %c0_16 = arith.constant 0 : index
    %35 = vector.load %arg2[%c1, %c0_15, %c0_16] : memref<2x16x48xbf16, #tpu.memory_space<vmem>>, vector<1x16x48xbf16>
    %36 = vector.shape_cast %35 : vector<1x16x48xbf16> to vector<16x48xbf16>
    %cst_17 = arith.constant dense<0.000000e+00> : vector<16x48xf32>
    %37 = tpu.matmul %34, %36, %cst_17 {dimension_numbers = #tpu.dot_dimension_numbers<[1], [0], [0], [1], [0, 0, 1, 1], [], []>} : vector<16x16xbf16>, vector<16x48xbf16>, vector<16x48xf32> -> vector<16x48xf32>
    %c1_18 = arith.constant 1 : index
    %c0_19 = arith.constant 0 : index
    %c0_20 = arith.constant 0 : index
    %38 = vector.load %arg3[%c1_18, %c0_19, %c0_20] : memref<2x1x48xf32, #tpu.memory_space<vmem>>, vector<1x1x48xf32>
    %39 = vector.shape_cast %38 : vector<1x1x48xf32> to vector<1x48xf32>
    %40 = vector.broadcast %39 : vector<1x48xf32> to vector<16x48xf32>
    %41 = arith.addf %37, %40 : vector<16x48xf32>
    %42 = vector.extract_strided_slice %41 {offsets = [0, 0], sizes = [16, 16], strides = [1, 1]} : vector<16x48xf32> to vector<16x16xf32>
    %43 = vector.shape_cast %42 : vector<16x16xf32> to vector<2x8x16xf32>
    %44 = arith.truncf %43 : vector<2x8x16xf32> to vector<2x8x16xbf16>
    %45 = vector.extract_strided_slice %41 {offsets = [0, 16], sizes = [16, 16], strides = [1, 1]} : vector<16x48xf32> to vector<16x16xf32>
    %46 = vector.shape_cast %45 : vector<16x16xf32> to vector<2x8x16xf32>
    %47 = arith.truncf %46 : vector<2x8x16xf32> to vector<2x8x16xbf16>
    %48 = vector.extract_strided_slice %41 {offsets = [0, 32], sizes = [16, 16], strides = [1, 1]} : vector<16x48xf32> to vector<16x16xf32>
    %49 = vector.shape_cast %48 : vector<16x16xf32> to vector<2x8x16xf32>
    %50 = arith.truncf %49 : vector<2x8x16xf32> to vector<2x8x16xbf16>
    "tpu.trace_start"() <{level = 10 : i32, message = "bqd,bkd->bqk"}> : () -> ()
    %cst_21 = arith.constant dense<0.000000e+00> : vector<2x8x8xf32>
    %51 = tpu.matmul %44, %47, %cst_21 {dimension_numbers = #tpu.dot_dimension_numbers<[2], [2], [1], [1], [0, 0, 0, 1, 1, 1], [0], [0]>} : vector<2x8x16xbf16>, vector<2x8x16xbf16>, vector<2x8x8xf32> -> vector<2x8x8xf32>
    "tpu.trace_stop"() : () -> ()
    %cst_22 = arith.constant dense<0xFF800000> : vector<2x8xf32>
    %52 = vector.multi_reduction <maximumf>, %51, %cst_22 [2] : vector<2x8x8xf32> to vector<2x8xf32>
    %53 = vector.shape_cast %52 : vector<2x8xf32> to vector<2x8x1xf32>
    %54 = vector.broadcast %53 : vector<2x8x1xf32> to vector<2x8x8xf32>
    %55 = arith.subf %51, %54 : vector<2x8x8xf32>
    %56 = math.exp %55 : vector<2x8x8xf32>
    %cst_23 = arith.constant dense<0.000000e+00> : vector<2x8xf32>
    %57 = vector.multi_reduction <add>, %56, %cst_23 [2] : vector<2x8x8xf32> to vector<2x8xf32>
    %58 = vector.shape_cast %57 : vector<2x8xf32> to vector<2x8x1xf32>
    %59 = tpu.reciprocal %58 {approx = true} : vector<2x8x1xf32> -> vector<2x8x1xf32>
    %60 = vector.broadcast %59 : vector<2x8x1xf32> to vector<2x8x8xf32>
    %61 = arith.mulf %56, %60 : vector<2x8x8xf32>
    %62 = arith.truncf %61 : vector<2x8x8xf32> to vector<2x8x8xbf16>
    "tpu.trace_start"() <{level = 10 : i32, message = "bqk,bkd->bqd"}> : () -> ()
    %cst_24 = arith.constant dense<0.000000e+00> : vector<2x8x16xf32>
    %63 = tpu.matmul %62, %50, %cst_24 {dimension_numbers = #tpu.dot_dimension_numbers<[2], [1], [1], [2], [0, 0, 0, 1, 1, 2], [0], [0]>} : vector<2x8x8xbf16>, vector<2x8x16xbf16>, vector<2x8x16xf32> -> vector<2x8x16xf32>
    "tpu.trace_stop"() : () -> ()
    %c0_25 = arith.constant 0 : index
    %c0_26 = arith.constant 0 : index
    %c16 = arith.constant 16 : index
    %64 = vector.load %arg4[%c0_25, %c0_26, %c16] : memref<2x8x32xf32, #tpu.memory_space<vmem>>, vector<2x8x16xf32>
    tpu.vector_store %arg4[%c0_25, %c0_26, %c16], %63 {strides = array<i32>} : memref<2x8x32xf32, #tpu.memory_space<vmem>>, vector<2x8x16xf32>,
    return
  }
  func.func @transform_0(%arg0: i32) -> (i32, i32, i32) {
    %c0_i32 = arith.constant 0 : i32
    %c0_i32_0 = arith.constant 0 : i32
    %c0_i32_1 = arith.constant 0 : i32
    return %arg0, %c0_i32, %c0_i32_0 : i32, i32, i32
  }
  func.func @transform_1(%arg0: i32) -> (i32, i32, i32) {
    %c0_i32 = arith.constant 0 : i32
    %c0_i32_0 = arith.constant 0 : i32
    %c0_i32_1 = arith.constant 0 : i32
    %c0_i32_2 = arith.constant 0 : i32
    return %c0_i32, %c0_i32_0, %c0_i32_1 : i32, i32, i32
  }
  func.func @transform_2(%arg0: i32) -> (i32, i32, i32) {
    %c0_i32 = arith.constant 0 : i32
    %c0_i32_0 = arith.constant 0 : i32
    %c0_i32_1 = arith.constant 0 : i32
    %c0_i32_2 = arith.constant 0 : i32
    return %c0_i32, %c0_i32_0, %c0_i32_1 : i32, i32, i32
  }
  func.func @transform_3(%arg0: i32) -> (i32, i32, i32) {
    %c0_i32 = arith.constant 0 : i32
    %c0_i32_0 = arith.constant 0 : i32
    %c0_i32_1 = arith.constant 0 : i32
    return %arg0, %c0_i32, %c0_i32_0 : i32, i32, i32
  }
}

</mosaic_0001>

<llo_original>
// kernel: tpu_custom_call.1
$region0: #{tpu_custom_call.1}
  #allocation0 [shape = 'u32[]', space=smem, size = 0x4, offset = 0x4, fixed_abs, tag = 'smem constant byte address 0x4 - core index']
  #allocation1 [shape = 'u32[144,128]{1,0:T(1,128)}', space=vmem, size = 0x12000, scoped, tag = 'internal scratch']
  %s0 = inlined_call_operand.hbm [shape: f32[2,8,32], index: 0, kind: input, shape index: {}]
  %s1 = inlined_call_operand.hbm [shape: bf16[2,16,48], index: 1, kind: input, shape index: {}]
  %s2 = inlined_call_operand.vmem [shape: f32[2,1,48], index: 2, kind: input, shape index: {}]
  %s3 = inlined_call_operand.hbm [shape: f32[2,8,32], index: 3, kind: output, shape index: {}]
  %s4 = sld [smem:[#allocation0]]
  $region30: #{tpu_custom_call.1} parent=0
    _
  %s6 = ssub.s32 1, %s4
  %s7 = scalar_select 0, %s6, %s4
  $region1: #{tpu_custom_call.1} parent=0
    #allocation2 [shape = 'u8[8192]{0}', space=vmem, size = 0x2000, scoped, tag = 'input window, operand 0, single buffered']
    #allocation3 [shape = 's32[1]{0}', space=sflag, size = 0x4, scoped, tag = 'scoped memory for tpu_custom_call.1']
    #allocation4 [shape = 's32[1]{0}', space=sflag, size = 0x4, scoped, tag = 'scoped memory for tpu_custom_call.1']
    #allocation5 [shape = 'u8[8192]{0}', space=vmem, size = 0x2000, scoped, tag = 'input window, operand 1, single buffered']
    #allocation6 [shape = 's32[1]{0}', space=sflag, size = 0x4, scoped, tag = 'scoped memory for tpu_custom_call.1']
    #allocation7 [shape = 'u8[8192]{0}', space=vmem, size = 0x2000, scoped, tag = 'output window, operand 0, single buffered']
    %8 = vsyncpa [#allocation3], 0
    %9 = vsyncpa [#allocation6], 0
    %10 = vsyncpa [#allocation4], 0
    // Predicated region
    $region2: #{tpu_custom_call.1} parent=1 // pred_check
      _
    $region3: #{tpu_custom_call.1} parent=1 // pred_check_branch
      %12 = sbr.rel (0) target = $region5
    $region4: #{tpu_custom_call.1} parent=1 // pred_region
      %s14 = ssub.s32 256, 256
      %15 = vsyncadd [#allocation3], %s14
      %s16 = sshll.u32 [#allocation2], 4
      %s17 = int_to_ptr.vmem [resolvable:$true] %s16
      %22 = dma.hbm_to_vmem [thread:$0]  %s0, 256, %s17, [#allocation3], 128, 128, 8
    $region5: #{tpu_custom_call.1} parent=1 // pred_fallthru
      _
    // Predicated region
    $region6: #{tpu_custom_call.1} parent=1 // pred_check
      _
    $region7: #{tpu_custom_call.1} parent=1 // pred_check_branch
      %24 = sbr.rel (0) target = $region9
    $region8: #{tpu_custom_call.1} parent=1 // pred_region
      %s26 = ssub.s32 256, 256
      %27 = vsyncadd [#allocation6], %s26
      %s28 = sshll.u32 [#allocation5], 4
      %s29 = int_to_ptr.vmem [resolvable:$true] %s28
      %34 = dma.hbm_to_vmem [thread:$0]  %s1, 256, %s29, [#allocation6], 64, 64, 4
    $region9: #{tpu_custom_call.1} parent=1 // pred_fallthru
      _
    // Predicated region
    $region10: #{tpu_custom_call.1} parent=1 // pred_check
      _
    $region11: #{tpu_custom_call.1} parent=1 // pred_check_branch
      %36 = sbr.rel (0) target = $region13
    $region12: #{tpu_custom_call.1} parent=1 // pred_region
      _
    $region13: #{tpu_custom_call.1} parent=1 // pred_fallthru
      _
    // Predicated region
    $region14: #{tpu_custom_call.1} parent=1 // pred_check
      _
    $region15: #{tpu_custom_call.1} parent=1 // pred_check_branch
      %38 = sbr.rel (0) target = $region17
    $region16: #{tpu_custom_call.1} parent=1 // pred_region
      %39 = dma.done [#allocation3], 256
    $region17: #{tpu_custom_call.1} parent=1 // pred_fallthru
      _
    // Predicated region
    $region18: #{tpu_custom_call.1} parent=1 // pred_check
      _
    $region19: #{tpu_custom_call.1} parent=1 // pred_check_branch
      %41 = sbr.rel (0) target = $region21
    $region20: #{tpu_custom_call.1} parent=1 // pred_region
      %42 = dma.done [#allocation6], 256
    $region21: #{tpu_custom_call.1} parent=1 // pred_fallthru
      _
    %v44 = vld [vmem:[#allocation2] sm:$0xff]
    %v45 = vld [vmem:[#allocation2 + $0x8] sm:$0xff]
    %v46 = vpack.c.bf16 %v44, %v44
    %v47 = vpack.c.bf16 %v45, %v45
    %v48 = vld [vmem:[#allocation5] sm:$0xf]
    %v49 = vld [vmem:[#allocation5 + $0x4] sm:$0xf]
    %v50 = vld [vmem:[%s2] sm:$0x1]
    %v52 = vlaneseq
    %v53 = vshrl.u32 %v52, 7
    %v54 = vsub.s32 0, %v53
    %v55 = vrot.slane %v50, %v54
    %v59 = vunpack.c.l.b16 %v46
    %v60 = vunpack.c.l.b16 %v47
    %v61 = vpack.c.b16 %v60, %v59
    %v64 = vunpack.c.l.b16 %v48
    %v65 = vunpack.c.l.b16 %v49
    %v66 = vpack.c.b16 %v65, %v64
    %vm68 = vcmask 130048
    %v70 = vsel %vm68, %v61, 0
    %72 = vmatprep.subr.bf16.mxu0 0
    %73 = vmatpush1.bf16.msra.mxu0 %v66
    %74 = vmatprep.subr.bf16.mxu0 0
    %75 = vmatpush1.bf16.msra.mxu0 0
    %76 = vmatprep.subr.bf16.mxu0 0
    %77 = vmatpush1.bf16.msra.mxu0 0
    %78 = vmatprep.subr.bf16.mxu0 0
    %79 = vmatpush1.bf16.msra.mxu0 0
    %80 = vmatprep.subr.bf16.mxu0 0
    %81 = vmatpush1.bf16.msra.mxu0 0
    %82 = vmatprep.subr.bf16.mxu0 0
    %83 = vmatpush1.bf16.msra.mxu0 0
    %84 = vmatprep.subr.bf16.mxu0 0
    %85 = vmatpush1.bf16.msra.mxu0 0
    %86 = vmatprep.subr.bf16.mxu0 0
    %87 = vmatpush1.bf16.msra.mxu0 0
    %88 = vmatprep.subr.bf16.mxu0 0
    %89 = vmatpush1.bf16.msra.mxu0 0
    %90 = vmatprep.subr.bf16.mxu0 0
    %91 = vmatpush1.bf16.msra.mxu0 0
    %92 = vmatprep.subr.bf16.mxu0 0
    %93 = vmatpush1.bf16.msra.mxu0 0
    %94 = vmatprep.subr.bf16.mxu0 0
    %95 = vmatpush1.bf16.msra.mxu0 0
    %96 = vmatprep.subr.bf16.mxu0 0
    %97 = vmatpush1.bf16.msra.mxu0 0
    %98 = vmatprep.subr.bf16.mxu0 0
    %99 = vmatpush1.bf16.msra.mxu0 0
    %100 = vmatprep.subr.bf16.mxu0 0
    %101 = vmatpush1.bf16.msra.mxu0 0
    %102 = vmatprep.subr.bf16.mxu0 0
    %103 = vmatpush1.bf16.msra.mxu0 0
    %104 = vmatprep.mubr.bf16.mxu0 0
    %105 = vmatmul.mubr.bf16.gmra.mrb[0].mxu0 %v70
    %v106 = vpop.f32.mrb[0].mxu0
    %v107 = vadd.f32 %v55, %v106
    %v108 = vpop.f32.mrb[0].mxu0
    %v109 = vpop.f32.mrb[0].mxu0
    %v110 = vadd.f32 %v55, %v109
    %v111 = vpop.f32.mrb[0].mxu0
    %112 = vdwg.mxu0
    %v113 = vpack.c.bf16 %v107, %v107
    %v114 = vpack.c.bf16 %v110, %v110
    %116 = vrot.lane.b32.xlu0 %v113, 112
    %v117 = vpop.permute.xlu0 %116
    %v119 = vsel %vm68, %v113, 0
    %v122 = vsel %vm68, %v117, 0
    %124 = vmatprep.subr.bf16.mxu0 0
    %125 = vmatpush1.bf16.xpose.msra.mxu0 %v122
    %126 = vmatprep.subr.bf16.mxu0 0
    %127 = vmatpush1.bf16.xpose.msra.mxu0 0
    %128 = vmatprep.subr.bf16.mxu0 0
    %129 = vmatpush1.bf16.xpose.msra.mxu0 0
    %130 = vmatprep.subr.bf16.mxu0 0
    %131 = vmatpush1.bf16.xpose.msra.mxu0 0
    %132 = vmatprep.subr.bf16.mxu0 0
    %133 = vmatpush1.bf16.xpose.msra.mxu0 0
    %134 = vmatprep.subr.bf16.mxu0 0
    %135 = vmatpush1.bf16.xpose.msra.mxu0 0
    %136 = vmatprep.subr.bf16.mxu0 0
    %137 = vmatpush1.bf16.xpose.msra.mxu0 0
    %138 = vmatprep.subr.bf16.mxu0 0
    %139 = vmatpush1.bf16.xpose.msra.mxu0 0
    %140 = vmatprep.subr.bf16.mxu0 0
    %141 = vmatpush1.bf16.xpose.msra.mxu0 0
    %142 = vmatprep.subr.bf16.mxu0 0
    %143 = vmatpush1.bf16.xpose.msra.mxu0 0
    %144 = vmatprep.subr.bf16.mxu0 0
    %145 = vmatpush1.bf16.xpose.msra.mxu0 0
    %146 = vmatprep.subr.bf16.mxu0 0
    %147 = vmatpush1.bf16.xpose.msra.mxu0 0
    %148 = vmatprep.subr.bf16.mxu0 0
    %149 = vmatpush1.bf16.xpose.msra.mxu0 0
    %150 = vmatprep.subr.bf16.mxu0 0
    %151 = vmatpush1.bf16.xpose.msra.mxu0 0
    %152 = vmatprep.subr.bf16.mxu0 0
    %153 = vmatpush1.bf16.xpose.msra.mxu0 0
    %154 = vmatprep.subr.bf16.mxu0 0
    %155 = vmatpush1.bf16.xpose.msra.mxu0 0
    %156 = vmatprep.mubr.bf16.mxu0 0
    %157 = vmatmul.mubr.bf16.gmra.mrb[0].mxu0 %v119
    %v158 = vpop.f32.mrb[0].mxu0
    %v159 = vadd.f32 0.0, %v158
    %v160 = vpop.f32.mrb[0].mxu0
    %v161 = vpop.f32.mrb[0].mxu0
    %v162 = vpop.f32.mrb[0].mxu0
    %163 = vdwg.mxu0
    %165 = vrot.lane.b32.xlu0 %v114, 112
    %v166 = vpop.permute.xlu0 %165
    %v168 = vsel %vm68, %v114, 0
    %v171 = vsel %vm68, %v166, 0
    %173 = vmatprep.subr.bf16.mxu0 0
    %174 = vmatpush1.bf16.xpose.msra.mxu0 %v171
    %175 = vmatprep.subr.bf16.mxu0 0
    %176 = vmatpush1.bf16.xpose.msra.mxu0 0
    %177 = vmatprep.subr.bf16.mxu0 0
    %178 = vmatpush1.bf16.xpose.msra.mxu0 0
    %179 = vmatprep.subr.bf16.mxu0 0
    %180 = vmatpush1.bf16.xpose.msra.mxu0 0
    %181 = vmatprep.subr.bf16.mxu0 0
    %182 = vmatpush1.bf16.xpose.msra.mxu0 0
    %183 = vmatprep.subr.bf16.mxu0 0
    %184 = vmatpush1.bf16.xpose.msra.mxu0 0
    %185 = vmatprep.subr.bf16.mxu0 0
    %186 = vmatpush1.bf16.xpose.msra.mxu0 0
    %187 = vmatprep.subr.bf16.mxu0 0
    %188 = vmatpush1.bf16.xpose.msra.mxu0 0
    %189 = vmatprep.subr.bf16.mxu0 0
    %190 = vmatpush1.bf16.xpose.msra.mxu0 0
    %191 = vmatprep.subr.bf16.mxu0 0
    %192 = vmatpush1.bf16.xpose.msra.mxu0 0
    %193 = vmatprep.subr.bf16.mxu0 0
    %194 = vmatpush1.bf16.xpose.msra.mxu0 0
    %195 = vmatprep.subr.bf16.mxu0 0
    %196 = vmatpush1.bf16.xpose.msra.mxu0 0
    %197 = vmatprep.subr.bf16.mxu0 0
    %198 = vmatpush1.bf16.xpose.msra.mxu0 0
    %199 = vmatprep.subr.bf16.mxu0 0
    %200 = vmatpush1.bf16.xpose.msra.mxu0 0
    %201 = vmatprep.subr.bf16.mxu0 0
    %202 = vmatpush1.bf16.xpose.msra.mxu0 0
    %203 = vmatprep.subr.bf16.mxu0 0
    %204 = vmatpush1.bf16.xpose.msra.mxu0 0
    %205 = vmatprep.mubr.bf16.mxu0 0
    %206 = vmatmul.mubr.bf16.gmra.mrb[0].mxu0 %v168
    %v207 = vpop.f32.mrb[0].mxu0
    %v208 = vadd.f32 0.0, %v207
    %v209 = vpop.f32.mrb[0].mxu0
    %v210 = vpop.f32.mrb[0].mxu0
    %v211 = vpop.f32.mrb[0].mxu0
    %212 = vdwg.mxu0
    %vm213 = vcmask 64512
    %v214 = vsel %vm213, %v159, -inf
    %215 = vmax.xlane.f32.xlu0 %v214
    %v216 = vpop.xlane.xlu0 %215
    %v217 = vsel %vm213, %v208, -inf
    %218 = vmax.xlane.f32.xlu0 %v217
    %v219 = vpop.xlane.xlu0 %218
    %v220 = vsub.f32 %v159, %v216
    %v221 = vsub.f32 %v208, %v219
    %v222 = vmul.f32 %v220, 1.442695
    %v223 = vpow.pop %v222
    %v224 = vmul.f32 %v221, 1.442695
    %v225 = vpow.pop %v224
    %v226 = vsel %vm213, %v223, 0.0
    %227 = vadd.xlane.f32.xlu0 %v226
    %v228 = vpop.xlane.xlu0 %227
    %v229 = vsel %vm213, %v225, 0.0
    %230 = vadd.xlane.f32.xlu0 %v229
    %v231 = vpop.xlane.xlu0 %230
    %v232 = vrcp.pop %v228
    %v233 = vrcp.pop %v231
    %v234 = vmul.f32 %v223, %v232
    %v235 = vmul.f32 %v225, %v233
    %v236 = vpack.c.bf16 %v234, %v234
    %v237 = vpack.c.bf16 %v235, %v235
    %238 = vrot.lane.b32.xlu0 %v113, 96
    %v239 = vpop.permute.xlu0 %238
    %v241 = vsel %vm213, %v236, 0
    %vm243 = vcmask 1043456
    %v245 = vsel %vm243, %v239, 0
    %247 = vmatprep.subr.bf16.mxu0 0
    %248 = vmatpush1.bf16.msra.mxu0 %v245
    %249 = vmatprep.subr.bf16.mxu0 0
    %250 = vmatpush1.bf16.msra.mxu0 0
    %251 = vmatprep.subr.bf16.mxu0 0
    %252 = vmatpush1.bf16.msra.mxu0 0
    %253 = vmatprep.subr.bf16.mxu0 0
    %254 = vmatpush1.bf16.msra.mxu0 0
    %255 = vmatprep.subr.bf16.mxu0 0
    %256 = vmatpush1.bf16.msra.mxu0 0
    %257 = vmatprep.subr.bf16.mxu0 0
    %258 = vmatpush1.bf16.msra.mxu0 0
    %259 = vmatprep.subr.bf16.mxu0 0
    %260 = vmatpush1.bf16.msra.mxu0 0
    %261 = vmatprep.subr.bf16.mxu0 0
    %262 = vmatpush1.bf16.msra.mxu0 0
    %263 = vmatprep.subr.bf16.mxu0 0
    %264 = vmatpush1.bf16.msra.mxu0 0
    %265 = vmatprep.subr.bf16.mxu0 0
    %266 = vmatpush1.bf16.msra.mxu0 0
    %267 = vmatprep.subr.bf16.mxu0 0
    %268 = vmatpush1.bf16.msra.mxu0 0
    %269 = vmatprep.subr.bf16.mxu0 0
    %270 = vmatpush1.bf16.msra.mxu0 0
    %271 = vmatprep.subr.bf16.mxu0 0
    %272 = vmatpush1.bf16.msra.mxu0 0
    %273 = vmatprep.subr.bf16.mxu0 0
    %274 = vmatpush1.bf16.msra.mxu0 0
    %275 = vmatprep.subr.bf16.mxu0 0
    %276 = vmatpush1.bf16.msra.mxu0 0
    %277 = vmatprep.subr.bf16.mxu0 0
    %278 = vmatpush1.bf16.msra.mxu0 0
    %279 = vmatprep.mubr.bf16.mxu0 0
    %280 = vmatmul.mubr.bf16.gmra.mrb[0].mxu0 %v241
    %v281 = vpop.f32.mrb[0].mxu0
    %v282 = vadd.f32 0.0, %v281
    %v283 = vpop.f32.mrb[0].mxu0
    %v284 = vpop.f32.mrb[0].mxu0
    %v285 = vpop.f32.mrb[0].mxu0
    %286 = vdwg.mxu0
    %287 = vrot.lane.b32.xlu0 %v114, 96
    %v288 = vpop.permute.xlu0 %287
    %v290 = vsel %vm213, %v237, 0
    %v293 = vsel %vm243, %v288, 0
    %295 = vmatprep.subr.bf16.mxu0 0
    %296 = vmatpush1.bf16.msra.mxu0 %v293
    %297 = vmatprep.subr.bf16.mxu0 0
    %298 = vmatpush1.bf16.msra.mxu0 0
    %299 = vmatprep.subr.bf16.mxu0 0
    %300 = vmatpush1.bf16.msra.mxu0 0
    %301 = vmatprep.subr.bf16.mxu0 0
    %302 = vmatpush1.bf16.msra.mxu0 0
    %303 = vmatprep.subr.bf16.mxu0 0
    %304 = vmatpush1.bf16.msra.mxu0 0
    %305 = vmatprep.subr.bf16.mxu0 0
    %306 = vmatpush1.bf16.msra.mxu0 0
    %307 = vmatprep.subr.bf16.mxu0 0
    %308 = vmatpush1.bf16.msra.mxu0 0
    %309 = vmatprep.subr.bf16.mxu0 0
    %310 = vmatpush1.bf16.msra.mxu0 0
    %311 = vmatprep.subr.bf16.mxu0 0
    %312 = vmatpush1.bf16.msra.mxu0 0
    %313 = vmatprep.subr.bf16.mxu0 0
    %314 = vmatpush1.bf16.msra.mxu0 0
    %315 = vmatprep.subr.bf16.mxu0 0
    %316 = vmatpush1.bf16.msra.mxu0 0
    %317 = vmatprep.subr.bf16.mxu0 0
    %318 = vmatpush1.bf16.msra.mxu0 0
    %319 = vmatprep.subr.bf16.mxu0 0
    %320 = vmatpush1.bf16.msra.mxu0 0
    %321 = vmatprep.subr.bf16.mxu0 0
    %322 = vmatpush1.bf16.msra.mxu0 0
    %323 = vmatprep.subr.bf16.mxu0 0
    %324 = vmatpush1.bf16.msra.mxu0 0
    %325 = vmatprep.subr.bf16.mxu0 0
    %326 = vmatpush1.bf16.msra.mxu0 0
    %327 = vmatprep.mubr.bf16.mxu0 0
    %328 = vmatmul.mubr.bf16.gmra.mrb[0].mxu0 %v290
    %v329 = vpop.f32.mrb[0].mxu0
    %v330 = vadd.f32 0.0, %v329
    %v331 = vpop.f32.mrb[0].mxu0
    %v332 = vpop.f32.mrb[0].mxu0
    %v333 = vpop.f32.mrb[0].mxu0
    %334 = vdwg.mxu0
    %335 = vst.msk [vmem:[#allocation7] sm:$0xff] %vm68, %v282
    %336 = vst.msk [vmem:[#allocation7 + $0x8] sm:$0xff] %vm68, %v330
    %s337 = scalar_lea.vmem [#allocation5], 8
    %v338 = vld [vmem:[%s337] sm:$0xf]
    %v339 = vld [vmem:[%s337 + $0x4] sm:$0xf]
    %s340 = scalar_lea.vmem %s2, 1
    %v341 = vld [vmem:[%s340] sm:$0x1]
    %v343 = vlaneseq
    %v344 = vshrl.u32 %v343, 7
    %v345 = vsub.s32 0, %v344
    %v346 = vrot.slane %v341, %v345
    %348 = vrot.lane.b32.xlu0 %v61, 112
    %v349 = vpop.permute.xlu0 %348
    %v352 = vunpack.c.l.b16 %v338
    %v353 = vunpack.c.l.b16 %v339
    %v354 = vpack.c.b16 %v353, %v352
    %v357 = vsel %vm68, %v349, 0
    %359 = vmatprep.subr.bf16.mxu0 0
    %360 = vmatpush1.bf16.msra.mxu0 %v354
    %361 = vmatprep.subr.bf16.mxu0 0
    %362 = vmatpush1.bf16.msra.mxu0 0
    %363 = vmatprep.subr.bf16.mxu0 0
    %364 = vmatpush1.bf16.msra.mxu0 0
    %365 = vmatprep.subr.bf16.mxu0 0
    %366 = vmatpush1.bf16.msra.mxu0 0
    %367 = vmatprep.subr.bf16.mxu0 0
    %368 = vmatpush1.bf16.msra.mxu0 0
    %369 = vmatprep.subr.bf16.mxu0 0
    %370 = vmatpush1.bf16.msra.mxu0 0
    %371 = vmatprep.subr.bf16.mxu0 0
    %372 = vmatpush1.bf16.msra.mxu0 0
    %373 = vmatprep.subr.bf16.mxu0 0
    %374 = vmatpush1.bf16.msra.mxu0 0
    %375 = vmatprep.subr.bf16.mxu0 0
    %376 = vmatpush1.bf16.msra.mxu0 0
    %377 = vmatprep.subr.bf16.mxu0 0
    %378 = vmatpush1.bf16.msra.mxu0 0
    %379 = vmatprep.subr.bf16.mxu0 0
    %380 = vmatpush1.bf16.msra.mxu0 0
    %381 = vmatprep.subr.bf16.mxu0 0
    %382 = vmatpush1.bf16.msra.mxu0 0
    %383 = vmatprep.subr.bf16.mxu0 0
    %384 = vmatpush1.bf16.msra.mxu0 0
    %385 = vmatprep.subr.bf16.mxu0 0
    %386 = vmatpush1.bf16.msra.mxu0 0
    %387 = vmatprep.subr.bf16.mxu0 0
    %388 = vmatpush1.bf16.msra.mxu0 0
    %389 = vmatprep.subr.bf16.mxu0 0
    %390 = vmatpush1.bf16.msra.mxu0 0
    %391 = vmatprep.mubr.bf16.mxu0 0
    %392 = vmatmul.mubr.bf16.gmra.mrb[0].mxu0 %v357
    %v393 = vpop.f32.mrb[0].mxu0
    %v394 = vadd.f32 %v346, %v393
    %v395 = vpop.f32.mrb[0].mxu0
    %v396 = vpop.f32.mrb[0].mxu0
    %v397 = vadd.f32 %v346, %v396
    %v398 = vpop.f32.mrb[0].mxu0
    %399 = vdwg.mxu0
    %v400 = vpack.c.bf16 %v394, %v394
    %v401 = vpack.c.bf16 %v397, %v397
    %403 = vrot.lane.b32.xlu0 %v400, 112
    %v404 = vpop.permute.xlu0 %403
    %v406 = vsel %vm68, %v400, 0
    %v409 = vsel %vm68, %v404, 0
    %411 = vmatprep.subr.bf16.mxu0 0
    %412 = vmatpush1.bf16.xpose.msra.mxu0 %v409
    %413 = vmatprep.subr.bf16.mxu0 0
    %414 = vmatpush1.bf16.xpose.msra.mxu0 0
    %415 = vmatprep.subr.bf16.mxu0 0
    %416 = vmatpush1.bf16.xpose.msra.mxu0 0
    %417 = vmatprep.subr.bf16.mxu0 0
    %418 = vmatpush1.bf16.xpose.msra.mxu0 0
    %419 = vmatprep.subr.bf16.mxu0 0
    %420 = vmatpush1.bf16.xpose.msra.mxu0 0
    %421 = vmatprep.subr.bf16.mxu0 0
    %422 = vmatpush1.bf16.xpose.msra.mxu0 0
    %423 = vmatprep.subr.bf16.mxu0 0
    %424 = vmatpush1.bf16.xpose.msra.mxu0 0
    %425 = vmatprep.subr.bf16.mxu0 0
    %426 = vmatpush1.bf16.xpose.msra.mxu0 0
    %427 = vmatprep.subr.bf16.mxu0 0
    %428 = vmatpush1.bf16.xpose.msra.mxu0 0
    %429 = vmatprep.subr.bf16.mxu0 0
    %430 = vmatpush1.bf16.xpose.msra.mxu0 0
    %431 = vmatprep.subr.bf16.mxu0 0
    %432 = vmatpush1.bf16.xpose.msra.mxu0 0
    %433 = vmatprep.subr.bf16.mxu0 0
    %434 = vmatpush1.bf16.xpose.msra.mxu0 0
    %435 = vmatprep.subr.bf16.mxu0 0
    %436 = vmatpush1.bf16.xpose.msra.mxu0 0
    %437 = vmatprep.subr.bf16.mxu0 0
    %438 = vmatpush1.bf16.xpose.msra.mxu0 0
    %439 = vmatprep.subr.bf16.mxu0 0
    %440 = vmatpush1.bf16.xpose.msra.mxu0 0
    %441 = vmatprep.subr.bf16.mxu0 0
    %442 = vmatpush1.bf16.xpose.msra.mxu0 0
    %443 = vmatprep.mubr.bf16.mxu0 0
    %444 = vmatmul.mubr.bf16.gmra.mrb[0].mxu0 %v406
    %v445 = vpop.f32.mrb[0].mxu0
    %v446 = vadd.f32 0.0, %v445
    %v447 = vpop.f32.mrb[0].mxu0
    %v448 = vpop.f32.mrb[0].mxu0
    %v449 = vpop.f32.mrb[0].mxu0
    %450 = vdwg.mxu0
    %452 = vrot.lane.b32.xlu0 %v401, 112
    %v453 = vpop.permute.xlu0 %452
    %v455 = vsel %vm68, %v401, 0
    %v458 = vsel %vm68, %v453, 0
    %460 = vmatprep.subr.bf16.mxu0 0
    %461 = vmatpush1.bf16.xpose.msra.mxu0 %v458
    %462 = vmatprep.subr.bf16.mxu0 0
    %463 = vmatpush1.bf16.xpose.msra.mxu0 0
    %464 = vmatprep.subr.bf16.mxu0 0
    %465 = vmatpush1.bf16.xpose.msra.mxu0 0
    %466 = vmatprep.subr.bf16.mxu0 0
    %467 = vmatpush1.bf16.xpose.msra.mxu0 0
    %468 = vmatprep.subr.bf16.mxu0 0
    %469 = vmatpush1.bf16.xpose.msra.mxu0 0
    %470 = vmatprep.subr.bf16.mxu0 0
    %471 = vmatpush1.bf16.xpose.msra.mxu0 0
    %472 = vmatprep.subr.bf16.mxu0 0
    %473 = vmatpush1.bf16.xpose.msra.mxu0 0
    %474 = vmatprep.subr.bf16.mxu0 0
    %475 = vmatpush1.bf16.xpose.msra.mxu0 0
    %476 = vmatprep.subr.bf16.mxu0 0
    %477 = vmatpush1.bf16.xpose.msra.mxu0 0
    %478 = vmatprep.subr.bf16.mxu0 0
    %479 = vmatpush1.bf16.xpose.msra.mxu0 0
    %480 = vmatprep.subr.bf16.mxu0 0
    %481 = vmatpush1.bf16.xpose.msra.mxu0 0
    %482 = vmatprep.subr.bf16.mxu0 0
    %483 = vmatpush1.bf16.xpose.msra.mxu0 0
    %484 = vmatprep.subr.bf16.mxu0 0
    %485 = vmatpush1.bf16.xpose.msra.mxu0 0
    %486 = vmatprep.subr.bf16.mxu0 0
    %487 = vmatpush1.bf16.xpose.msra.mxu0 0
    %488 = vmatprep.subr.bf16.mxu0 0
    %489 = vmatpush1.bf16.xpose.msra.mxu0 0
    %490 = vmatprep.subr.bf16.mxu0 0
    %491 = vmatpush1.bf16.xpose.msra.mxu0 0
    %492 = vmatprep.mubr.bf16.mxu0 0
    %493 = vmatmul.mubr.bf16.gmra.mrb[0].mxu0 %v455
    %v494 = vpop.f32.mrb[0].mxu0
    %v495 = vadd.f32 0.0, %v494
    %v496 = vpop.f32.mrb[0].mxu0
    %v497 = vpop.f32.mrb[0].mxu0
    %v498 = vpop.f32.mrb[0].mxu0
    %499 = vdwg.mxu0
    %v500 = vsel %vm213, %v446, -inf
    %501 = vmax.xlane.f32.xlu0 %v500
    %v502 = vpop.xlane.xlu0 %501
    %v503 = vsel %vm213, %v495, -inf
    %504 = vmax.xlane.f32.xlu0 %v503
    %v505 = vpop.xlane.xlu0 %504
    %v506 = vsub.f32 %v446, %v502
    %v507 = vsub.f32 %v495, %v505
    %v508 = vmul.f32 %v506, 1.442695
    %v509 = vpow.pop %v508
    %v510 = vmul.f32 %v507, 1.442695
    %v511 = vpow.pop %v510
    %v512 = vsel %vm213, %v509, 0.0
    %513 = vadd.xlane.f32.xlu0 %v512
    %v514 = vpop.xlane.xlu0 %513
    %v515 = vsel %vm213, %v511, 0.0
    %516 = vadd.xlane.f32.xlu0 %v515
    %v517 = vpop.xlane.xlu0 %516
    %v518 = vrcp.pop %v514
    %v519 = vrcp.pop %v517
    %v520 = vmul.f32 %v509, %v518
    %v521 = vmul.f32 %v511, %v519
    %v522 = vpack.c.bf16 %v520, %v520
    %v523 = vpack.c.bf16 %v521, %v521
    %524 = vrot.lane.b32.xlu0 %v400, 96
    %v525 = vpop.permute.xlu0 %524
    %v527 = vsel %vm213, %v522, 0
    %v530 = vsel %vm243, %v525, 0
    %532 = vmatprep.subr.bf16.mxu0 0
    %533 = vmatpush1.bf16.msra.mxu0 %v530
    %534 = vmatprep.subr.bf16.mxu0 0
    %535 = vmatpush1.bf16.msra.mxu0 0
    %536 = vmatprep.subr.bf16.mxu0 0
    %537 = vmatpush1.bf16.msra.mxu0 0
    %538 = vmatprep.subr.bf16.mxu0 0
    %539 = vmatpush1.bf16.msra.mxu0 0
    %540 = vmatprep.subr.bf16.mxu0 0
    %541 = vmatpush1.bf16.msra.mxu0 0
    %542 = vmatprep.subr.bf16.mxu0 0
    %543 = vmatpush1.bf16.msra.mxu0 0
    %544 = vmatprep.subr.bf16.mxu0 0
    %545 = vmatpush1.bf16.msra.mxu0 0
    %546 = vmatprep.subr.bf16.mxu0 0
    %547 = vmatpush1.bf16.msra.mxu0 0
    %548 = vmatprep.subr.bf16.mxu0 0
    %549 = vmatpush1.bf16.msra.mxu0 0
    %550 = vmatprep.subr.bf16.mxu0 0
    %551 = vmatpush1.bf16.msra.mxu0 0
    %552 = vmatprep.subr.bf16.mxu0 0
    %553 = vmatpush1.bf16.msra.mxu0 0
    %554 = vmatprep.subr.bf16.mxu0 0
    %555 = vmatpush1.bf16.msra.mxu0 0
    %556 = vmatprep.subr.bf16.mxu0 0
    %557 = vmatpush1.bf16.msra.mxu0 0
    %558 = vmatprep.subr.bf16.mxu0 0
    %559 = vmatpush1.bf16.msra.mxu0 0
    %560 = vmatprep.subr.bf16.mxu0 0
    %561 = vmatpush1.bf16.msra.mxu0 0
    %562 = vmatprep.subr.bf16.mxu0 0
    %563 = vmatpush1.bf16.msra.mxu0 0
    %564 = vmatprep.mubr.bf16.mxu0 0
    %565 = vmatmul.mubr.bf16.gmra.mrb[0].mxu0 %v527
    %v566 = vpop.f32.mrb[0].mxu0
    %v567 = vadd.f32 0.0, %v566
    %v568 = vpop.f32.mrb[0].mxu0
    %v569 = vpop.f32.mrb[0].mxu0
    %v570 = vpop.f32.mrb[0].mxu0
    %571 = vdwg.mxu0
    %572 = vrot.lane.b32.xlu0 %v401, 96
    %v573 = vpop.permute.xlu0 %572
    %v575 = vsel %vm213, %v523, 0
    %v578 = vsel %vm243, %v573, 0
    %580 = vmatprep.subr.bf16.mxu0 0
    %581 = vmatpush1.bf16.msra.mxu0 %v578
    %582 = vmatprep.subr.bf16.mxu0 0
    %583 = vmatpush1.bf16.msra.mxu0 0
    %584 = vmatprep.subr.bf16.mxu0 0
    %585 = vmatpush1.bf16.msra.mxu0 0
    %586 = vmatprep.subr.bf16.mxu0 0
    %587 = vmatpush1.bf16.msra.mxu0 0
    %588 = vmatprep.subr.bf16.mxu0 0
    %589 = vmatpush1.bf16.msra.mxu0 0
    %590 = vmatprep.subr.bf16.mxu0 0
    %591 = vmatpush1.bf16.msra.mxu0 0
    %592 = vmatprep.subr.bf16.mxu0 0
    %593 = vmatpush1.bf16.msra.mxu0 0
    %594 = vmatprep.subr.bf16.mxu0 0
    %595 = vmatpush1.bf16.msra.mxu0 0
    %596 = vmatprep.subr.bf16.mxu0 0
    %597 = vmatpush1.bf16.msra.mxu0 0
    %598 = vmatprep.subr.bf16.mxu0 0
    %599 = vmatpush1.bf16.msra.mxu0 0
    %600 = vmatprep.subr.bf16.mxu0 0
    %601 = vmatpush1.bf16.msra.mxu0 0
    %602 = vmatprep.subr.bf16.mxu0 0
    %603 = vmatpush1.bf16.msra.mxu0 0
    %604 = vmatprep.subr.bf16.mxu0 0
    %605 = vmatpush1.bf16.msra.mxu0 0
    %606 = vmatprep.subr.bf16.mxu0 0
    %607 = vmatpush1.bf16.msra.mxu0 0
    %608 = vmatprep.subr.bf16.mxu0 0
    %609 = vmatpush1.bf16.msra.mxu0 0
    %610 = vmatprep.subr.bf16.mxu0 0
    %611 = vmatpush1.bf16.msra.mxu0 0
    %612 = vmatprep.mubr.bf16.mxu0 0
    %613 = vmatmul.mubr.bf16.gmra.mrb[0].mxu0 %v575
    %v614 = vpop.f32.mrb[0].mxu0
    %v615 = vadd.f32 0.0, %v614
    %v616 = vpop.f32.mrb[0].mxu0
    %v617 = vpop.f32.mrb[0].mxu0
    %v618 = vpop.f32.mrb[0].mxu0
    %619 = vdwg.mxu0
    %622 = vrot.lane.b32.xlu0 %v567, 16
    %v623 = vpop.permute.xlu0 %622
    %624 = vrot.lane.b32.xlu0 %v615, 16
    %v625 = vpop.permute.xlu0 %624
    %vm628 = vcmask 261248
    %629 = vst.msk [vmem:[#allocation7] sm:$0xff] %vm628, %v623
    %630 = vst.msk [vmem:[#allocation7 + $0x8] sm:$0xff] %vm628, %v625
    // Predicated region
    $region22: #{tpu_custom_call.1} parent=1 // pred_check
      _
    $region23: #{tpu_custom_call.1} parent=1 // pred_check_branch
      %632 = sbr.rel (0) target = $region25
    $region24: #{tpu_custom_call.1} parent=1 // pred_region
      %s634 = ssub.s32 256, 256
      %635 = vsyncadd [#allocation4], %s634
      %s636 = sshll.u32 [#allocation7], 4
      %s637 = int_to_ptr.vmem [resolvable:$true] %s636
      %642 = dma.vmem_to_hbm [thread:$0]  %s637, 256, %s3, [#allocation4], 128, 128, 8
    $region25: #{tpu_custom_call.1} parent=1 // pred_fallthru
      _
    // Predicated region
    $region26: #{tpu_custom_call.1} parent=1 // pred_check
      _
    $region27: #{tpu_custom_call.1} parent=1 // pred_check_branch
      %644 = sbr.rel (0) target = $region29
    $region28: #{tpu_custom_call.1} parent=1 // pred_region
      %645 = dma.done [#allocation4], 256
    $region29: #{tpu_custom_call.1} parent=1 // pred_fallthru
      _
    %646 = vsyncpa [#allocation3], 1
    %647 = vsyncpa [#allocation6], 1
    %648 = vsyncpa [#allocation4], 1

</llo_original>
